<compile_context>
chip_gen: v5e
topology: v5e:2x2
jax: 0.10.0
libtpu: 0.0.40
codegen_flags: <defaults>
</compile_context>

<pallas_src>
import math
from functools import partial

import jax
import jax.numpy as jnp
from jax.experimental import pallas as pl
from jax.experimental.pallas import tpu as pltpu


def _gelu_tanh(x):
    # tanh-approximate GELU (same formula used in kernel and reference).
    return 0.5 * x * (1.0 + jnp.tanh(0.7978845608028654 * (x + 0.044715 * x * x * x)))


def encoder_layer_kernel(x_ref, wqkv_ref, w1_ref, b1_ref, w2_ref, b2_ref, o_ref,
                         *, B, T, H, D):
    # x_ref: (B*T, E) slab (whole batch, one grid step); weights fully resident.
    E = H * D

    x = x_ref[...].astype(jnp.float32)                     # (B*T, E)

    # ---- LayerNorm over E (elementwise_affine=False, eps=1e-5) ----
    mu = jnp.mean(x, axis=-1, keepdims=True)
    xc = x - mu
    var = jnp.mean(xc * xc, axis=-1, keepdims=True)
    xn = xc * jax.lax.rsqrt(var + 1e-5)                    # (B*T, E)

    # ---- fused per-head V / Q / K projections: one MXU matmul over all rows ----
    # Q/K columns already carry the D**-0.25 factor (folded at pack time).
    proj = jnp.dot(xn, wqkv_ref[...], preferred_element_type=jnp.float32)  # (B*T, E+2H)

    v_all = proj[:, :E].reshape(B, T, E)                   # per-head V in cols h*D:(h+1)*D
    q_all = proj[:, E:E + H].reshape(B, T, H)              # per-head scalar Q (scaled)
    k_all = proj[:, E + H:E + 2 * H].reshape(B, T, H)      # per-head scalar K (scaled)
    k_t = jnp.transpose(k_all, (0, 2, 1))                  # (B, H, T): one small XLU transpose

    head_outs = []
    for h in range(H):                                     # static unroll, H is tiny
        qh = q_all[:, :, h:h + 1]                          # (B, T, 1)  -> lane broadcast
        kh = k_t[:, h:h + 1, :]                            # (B, 1, T)  -> sublane broadcast
        diff = qh - kh                                     # diff[b,i,j] = scale*(Q_i - K_j)
        s = -(diff * diff)                                 # scores <= 0: exp never overflows
        p = jnp.exp(s)                                     # (B, T, T)
        denom = jnp.maximum(jnp.sum(p, axis=-1, keepdims=True), 1e-30)  # underflow guard
        p = p * (1.0 / denom)                              # exact softmax normalization
        head_outs.append(
            jnp.einsum('bij,bjd->bid', p, v_all[:, :, h * D:(h + 1) * D],
                       preferred_element_type=jnp.float32))             # (B, T, D)
    head_cat = jnp.concatenate(head_outs, axis=-1).reshape(B * T, E)

    # ---- merger MLP: Linear(E->F) -> GELU -> Linear(F->E), then residual ----
    h1 = jnp.dot(head_cat, w1_ref[...], preferred_element_type=jnp.float32) + b1_ref[...]
    g = _gelu_tanh(h1)                                     # (B*T, F)
    h2 = jnp.dot(g, w2_ref[...], preferred_element_type=jnp.float32) + b2_ref[...]

    o_ref[...] = (h2 + x).astype(o_ref.dtype)              # residual with pre-norm input


def pack_params(wv, wq, wk, w1, b1, w2, b2, dtype=jnp.float32):
    """One-time (non-jitted-per-call) packing of module weights into kernel layout.

    wv: (H, D, D); wq, wk: (H, 1, D); w1: (F, E); b1: (F,); w2: (E, F); b2: (E,)
    (all in nn.Linear (out, in) layout).

    Returns:
      w_qkv: (E, E + 2H)  columns [0:E]   = block-diagonal V weights (pre-transposed)
                          columns [E:E+H] = per-head scalar Q weights * D**-0.25
                          columns [E+H:]  = per-head scalar K weights * D**-0.25
      w1_t: (E, F), b1_r: (1, F), w2_t: (F, E), b2_r: (1, E)
    """
    H, D, _ = wv.shape
    E = H * D
    F = w1.shape[0]
    scale = D ** -0.25                                     # so diff^2 == (Q-K)^2 / sqrt(D)

    wv_bd = jnp.zeros((E, E), dtype)
    wq_pk = jnp.zeros((E, H), dtype)
    wk_pk = jnp.zeros((E, H), dtype)
    for h in range(H):
        wv_bd = wv_bd.at[h * D:(h + 1) * D, h * D:(h + 1) * D].set(wv[h].T)
        wq_pk = wq_pk.at[h * D:(h + 1) * D, h].set(wq[h][0] * scale)
        wk_pk = wk_pk.at[h * D:(h + 1) * D, h].set(wk[h][0] * scale)
    w_qkv = jnp.concatenate([wv_bd, wq_pk, wk_pk], axis=1).astype(dtype)   # (E, E+2H)

    w1_t = jnp.transpose(w1).astype(dtype)                 # (E, F)
    w2_t = jnp.transpose(w2).astype(dtype)                 # (F, E)
    b1_r = b1.reshape(1, F).astype(dtype)
    b2_r = b2.reshape(1, E).astype(dtype)
    return w_qkv, w1_t, b1_r, w2_t, b2_r


@jax.jit
def encoder_layer_forward(x, w_qkv, w1_t, b1_r, w2_t, b2_r):
    """x: (B, T, E); packed weights from pack_params()."""
    B, T, E = x.shape
    H = (w_qkv.shape[1] - E) // 2
    D = E // H
    F = w1_t.shape[1]
    assert H * D == E

    x2d = x.reshape(B * T, E)                              # free metadata reshape in XLA

    out2d = pl.pallas_call(
        partial(encoder_layer_kernel, B=B, T=T, H=H, D=D),
        out_shape=jax.ShapeDtypeStruct((B * T, E), x.dtype),
        grid=(1,),                                         # single step: whole batch at once
        in_specs=[
            pl.BlockSpec((B * T, E), lambda i: (0, 0)),            # x slab (all rows)
            pl.BlockSpec((E, E + 2 * H), lambda i: (0, 0)),        # fused QKV weight
            pl.BlockSpec((E, F), lambda i: (0, 0)),                # merger W1^T
            pl.BlockSpec((1, F), lambda i: (0, 0)),                # merger b1
            pl.BlockSpec((F, E), lambda i: (0, 0)),                # merger W2^T
            pl.BlockSpec((1, E), lambda i: (0, 0)),                # merger b2
        ],
        out_specs=pl.BlockSpec((B * T, E), lambda i: (0, 0)),
        compiler_params=pltpu.CompilerParams(
            dimension_semantics=("arbitrary",)),
    )(x2d, w_qkv, w1_t, b1_r, w2_t, b2_r)

    return out2d.reshape(B, T, E)


def encoder_layer_reference(x, wv, wq, wk, w1, b1, w2, b2):
    """Pure-JAX reference mirroring the PyTorch forward (with linear QLayer surrogates)."""
    B, T, E = x.shape
    H, D, _ = wv.shape
    mu = jnp.mean(x, axis=-1, keepdims=True)
    var = jnp.mean((x - mu) ** 2, axis=-1, keepdims=True)
    xn = (x - mu) / jnp.sqrt(var + 1e-5)
    outs = []
    for h in range(H):
        xh = xn[..., h * D:(h + 1) * D]                              # (B, T, D)
        v = jnp.einsum("btd,ed->bte", xh, wv[h])                     # (B, T, D)
        q = jnp.einsum("btd,od->bto", xh, wq[h])[..., 0]             # (B, T)
        k = jnp.einsum("btd,od->bto", xh, wk[h])[..., 0]             # (B, T)
        a = -((q[:, :, None] - k[:, None, :]) ** 2)                  # (B, T, T)
        p = jax.nn.softmax(a / math.sqrt(D), axis=-1)
        outs.append(jnp.einsum("bij,bjd->bid", p, v))                # (B, T, D)
    head_cat = jnp.concatenate(outs, axis=-1)                        # (B, T, E)
    h1 = jnp.einsum("bte,fe->btf", head_cat, w1) + b1
    g = _gelu_tanh(h1)
    h2 = jnp.einsum("btf,ef->bte", g, w2) + b2
    return h2 + x


if __name__ == "__main__":
    # Module config: Token_Dim=T, Embed_Dim=E, head_dimension=H, ff_dim=F
    B, T, E, H, F = 2, 8, 32, 4, 64
    D = E // H

    key = jax.random.PRNGKey(0)
    kx, kv, kq, kk, k1, kb1, k2, kb2 = jax.random.split(key, 8)
    x = jax.random.normal(kx, (B, T, E), dtype=jnp.float32)

    bd = 1.0 / math.sqrt(D)
    wv = jax.random.uniform(kv, (H, D, D), jnp.float32, -bd, bd)     # V surrogate (D->D)
    wq = jax.random.uniform(kq, (H, 1, D), jnp.float32, -bd, bd)     # Q surrogate (D->1)
    wk = jax.random.uniform(kk, (H, 1, D), jnp.float32, -bd, bd)     # K surrogate (D->1)
    be = 1.0 / math.sqrt(E)
    w1 = jax.random.uniform(k1, (F, E), jnp.float32, -be, be)        # merger Linear(E->F)
    b1 = jax.random.uniform(kb1, (F,), jnp.float32, -be, be)
    bf = 1.0 / math.sqrt(F)
    w2 = jax.random.uniform(k2, (E, F), jnp.float32, -bf, bf)        # merger Linear(F->E)
    b2 = jax.random.uniform(kb2, (E,), jnp.float32, -bf, bf)

    # One-time parameter packing (outside the jitted forward).
    packed = jax.block_until_ready(pack_params(wv, wq, wk, w1, b1, w2, b2))

    out = jax.block_until_ready(encoder_layer_forward(x, *packed))
    ref = jax.block_until_ready(encoder_layer_reference(x, wv, wq, wk, w1, b1, w2, b2))

    assert out.shape == (B, T, E), out.shape
    err = float(jnp.max(jnp.abs(out - ref)))
    if not jnp.allclose(out, ref, atol=2e-4, rtol=2e-4):
        raise AssertionError(f"Pallas output mismatch vs reference (max abs err {err:.3e})")
    print("KERNEL_OK")
</pallas_src>

<mosaic_0001>
module attributes {stable_mosaic.version = 11 : i64} {
  func.func @encoder_layer_kernel(%arg0: i32, %arg1: memref<16x32xf32, #tpu.memory_space<vmem>>, %arg2: memref<32x40xf32, #tpu.memory_space<vmem>>, %arg3: memref<32x64xf32, #tpu.memory_space<vmem>>, %arg4: memref<1x64xf32, #tpu.memory_space<vmem>>, %arg5: memref<64x32xf32, #tpu.memory_space<vmem>>, %arg6: memref<1x32xf32, #tpu.memory_space<vmem>>, %arg7: memref<16x32xf32, #tpu.memory_space<vmem>>) attributes {dimension_semantics = [#tpu.dimension_semantics<arbitrary>], iteration_bounds = array<i64: 1>, scalar_prefetch = 0 : i64, scratch_operands = 0 : i64, tpu.core_type = #tpu.core_type<tc>, window_params = [{pipeline_mode = #tpu.pipeline_mode<synchronous>, transform_indices = @transform_0, window_bounds = array<i64: 16, 32>}, {pipeline_mode = #tpu.pipeline_mode<synchronous>, transform_indices = @transform_1, window_bounds = array<i64: 32, 40>}, {pipeline_mode = #tpu.pipeline_mode<synchronous>, transform_indices = @transform_2, window_bounds = array<i64: 32, 64>}, {pipeline_mode = #tpu.pipeline_mode<synchronous>, transform_indices = @transform_3, window_bounds = array<i64: 1, 64>}, {pipeline_mode = #tpu.pipeline_mode<synchronous>, transform_indices = @transform_4, window_bounds = array<i64: 64, 32>}, {pipeline_mode = #tpu.pipeline_mode<synchronous>, transform_indices = @transform_5, window_bounds = array<i64: 1, 32>}, {pipeline_mode = #tpu.pipeline_mode<synchronous>, transform_indices = @transform_6, window_bounds = array<i64: 16, 32>}]} {
    %c0 = arith.constant 0 : index
    %c0_0 = arith.constant 0 : index
    %0 = vector.load %arg1[%c0, %c0_0] : memref<16x32xf32, #tpu.memory_space<vmem>>, vector<16x32xf32>
    %cst = arith.constant dense<0.000000e+00> : vector<16xf32>
    %1 = vector.multi_reduction <add>, %0, %cst [1] : vector<16x32xf32> to vector<16xf32>
    %2 = vector.shape_cast %1 : vector<16xf32> to vector<16x1xf32>
    %cst_1 = arith.constant 3.200000e+01 : f32
    %3 = vector.broadcast %cst_1 : f32 to vector<16x1xf32>
    %4 = arith.divf %2, %3 : vector<16x1xf32>
    %5 = vector.broadcast %4 : vector<16x1xf32> to vector<16x32xf32>
    %6 = arith.subf %0, %5 : vector<16x32xf32>
    %7 = arith.mulf %6, %6 : vector<16x32xf32>
    %cst_2 = arith.constant dense<0.000000e+00> : vector<16xf32>
    %8 = vector.multi_reduction <add>, %7, %cst_2 [1] : vector<16x32xf32> to vector<16xf32>
    %9 = vector.shape_cast %8 : vector<16xf32> to vector<16x1xf32>
    %cst_3 = arith.constant 3.200000e+01 : f32
    %10 = vector.broadcast %cst_3 : f32 to vector<16x1xf32>
    %11 = arith.divf %9, %10 : vector<16x1xf32>
    %cst_4 = arith.constant 9.99999974E-6 : f32
    %12 = vector.broadcast %cst_4 : f32 to vector<16x1xf32>
    %13 = arith.addf %11, %12 : vector<16x1xf32>
    %14 = math.rsqrt %13 : vector<16x1xf32>
    %15 = vector.broadcast %14 : vector<16x1xf32> to vector<16x32xf32>
    %16 = arith.mulf %6, %15 : vector<16x32xf32>
    %c0_5 = arith.constant 0 : index
    %c0_6 = arith.constant 0 : index
    %17 = vector.load %arg2[%c0_5, %c0_6] : memref<32x40xf32, #tpu.memory_space<vmem>>, vector<32x40xf32>
    %cst_7 = arith.constant dense<0.000000e+00> : vector<16x40xf32>
    %18 = tpu.matmul %16, %17, %cst_7 {dimension_numbers = #tpu.dot_dimension_numbers<[1], [0], [0], [1], [0, 0, 1, 1], [], []>} : vector<16x32xf32>, vector<32x40xf32>, vector<16x40xf32> -> vector<16x40xf32>
    %19 = vector.extract_strided_slice %18 {offsets = [0, 0], sizes = [16, 32], strides = [1, 1]} : vector<16x40xf32> to vector<16x32xf32>
    %20 = vector.shape_cast %19 : vector<16x32xf32> to vector<2x8x32xf32>
    %21 = vector.extract_strided_slice %18 {offsets = [0, 32], sizes = [16, 4], strides = [1, 1]} : vector<16x40xf32> to vector<16x4xf32>
    %22 = vector.shape_cast %21 : vector<16x4xf32> to vector<2x8x4xf32>
    %23 = vector.extract_strided_slice %18 {offsets = [0, 36], sizes = [16, 4], strides = [1, 1]} : vector<16x40xf32> to vector<16x4xf32>
    %24 = vector.shape_cast %23 : vector<16x4xf32> to vector<2x8x4xf32>
    %25 = tpu.transpose %24, [0, 2, 1] : vector<2x8x4xf32> -> vector<2x4x8xf32>
    %26 = vector.extract_strided_slice %22 {offsets = [0, 0, 0], sizes = [2, 8, 1], strides = [1, 1, 1]} : vector<2x8x4xf32> to vector<2x8x1xf32>
    %27 = vector.extract_strided_slice %25 {offsets = [0, 0, 0], sizes = [2, 1, 8], strides = [1, 1, 1]} : vector<2x4x8xf32> to vector<2x1x8xf32>
    %28 = vector.broadcast %26 : vector<2x8x1xf32> to vector<2x8x8xf32>
    %29 = vector.broadcast %27 : vector<2x1x8xf32> to vector<2x8x8xf32>
    %30 = arith.subf %28, %29 : vector<2x8x8xf32>
    %31 = arith.mulf %30, %30 : vector<2x8x8xf32>
    %cst_8 = arith.constant 0.000000e+00 : f32
    %32 = vector.broadcast %cst_8 : f32 to vector<2x8x8xf32>
    %33 = arith.subf %32, %31 : vector<2x8x8xf32>
    %34 = math.exp %33 : vector<2x8x8xf32>
    %cst_9 = arith.constant dense<0.000000e+00> : vector<2x8xf32>
    %35 = vector.multi_reduction <add>, %34, %cst_9 [2] : vector<2x8x8xf32> to vector<2x8xf32>
    %36 = vector.shape_cast %35 : vector<2x8xf32> to vector<2x8x1xf32>
    %cst_10 = arith.constant 1.000000e-30 : f32
    %37 = vector.broadcast %cst_10 : f32 to vector<2x8x1xf32>
    %38 = arith.maximumf %36, %37 : vector<2x8x1xf32>
    %cst_11 = arith.constant 1.000000e+00 : f32
    %39 = vector.broadcast %cst_11 : f32 to vector<2x8x1xf32>
    %40 = arith.divf %39, %38 : vector<2x8x1xf32>
    %41 = vector.broadcast %40 : vector<2x8x1xf32> to vector<2x8x8xf32>
    %42 = arith.mulf %34, %41 : vector<2x8x8xf32>
    %43 = vector.extract_strided_slice %20 {offsets = [0, 0, 0], sizes = [2, 8, 8], strides = [1, 1, 1]} : vector<2x8x32xf32> to vector<2x8x8xf32>
    "tpu.trace_start"() <{level = 10 : i32, message = "bij,bjd->bid"}> : () -> ()
    %cst_12 = arith.constant dense<0.000000e+00> : vector<2x8x8xf32>
    %44 = tpu.matmul %42, %43, %cst_12 {dimension_numbers = #tpu.dot_dimension_numbers<[2], [1], [1], [2], [0, 0, 0, 1, 1, 2], [0], [0]>} : vector<2x8x8xf32>, vector<2x8x8xf32>, vector<2x8x8xf32> -> vector<2x8x8xf32>
    "tpu.trace_stop"() : () -> ()
    %45 = vector.extract_strided_slice %22 {offsets = [0, 0, 1], sizes = [2, 8, 1], strides = [1, 1, 1]} : vector<2x8x4xf32> to vector<2x8x1xf32>
    %46 = vector.extract_strided_slice %25 {offsets = [0, 1, 0], sizes = [2, 1, 8], strides = [1, 1, 1]} : vector<2x4x8xf32> to vector<2x1x8xf32>
    %47 = vector.broadcast %45 : vector<2x8x1xf32> to vector<2x8x8xf32>
    %48 = vector.broadcast %46 : vector<2x1x8xf32> to vector<2x8x8xf32>
    %49 = arith.subf %47, %48 : vector<2x8x8xf32>
    %50 = arith.mulf %49, %49 : vector<2x8x8xf32>
    %cst_13 = arith.constant 0.000000e+00 : f32
    %51 = vector.broadcast %cst_13 : f32 to vector<2x8x8xf32>
    %52 = arith.subf %51, %50 : vector<2x8x8xf32>
    %53 = math.exp %52 : vector<2x8x8xf32>
    %cst_14 = arith.constant dense<0.000000e+00> : vector<2x8xf32>
    %54 = vector.multi_reduction <add>, %53, %cst_14 [2] : vector<2x8x8xf32> to vector<2x8xf32>
    %55 = vector.shape_cast %54 : vector<2x8xf32> to vector<2x8x1xf32>
    %cst_15 = arith.constant 1.000000e-30 : f32
    %56 = vector.broadcast %cst_15 : f32 to vector<2x8x1xf32>
    %57 = arith.maximumf %55, %56 : vector<2x8x1xf32>
    %cst_16 = arith.constant 1.000000e+00 : f32
    %58 = vector.broadcast %cst_16 : f32 to vector<2x8x1xf32>
    %59 = arith.divf %58, %57 : vector<2x8x1xf32>
    %60 = vector.broadcast %59 : vector<2x8x1xf32> to vector<2x8x8xf32>
    %61 = arith.mulf %53, %60 : vector<2x8x8xf32>
    %62 = vector.extract_strided_slice %20 {offsets = [0, 0, 8], sizes = [2, 8, 8], strides = [1, 1, 1]} : vector<2x8x32xf32> to vector<2x8x8xf32>
    "tpu.trace_start"() <{level = 10 : i32, message = "bij,bjd->bid"}> : () -> ()
    %cst_17 = arith.constant dense<0.000000e+00> : vector<2x8x8xf32>
    %63 = tpu.matmul %61, %62, %cst_17 {dimension_numbers = #tpu.dot_dimension_numbers<[2], [1], [1], [2], [0, 0, 0, 1, 1, 2], [0], [0]>} : vector<2x8x8xf32>, vector<2x8x8xf32>, vector<2x8x8xf32> -> vector<2x8x8xf32>
    "tpu.trace_stop"() : () -> ()
    %64 = vector.extract_strided_slice %22 {offsets = [0, 0, 2], sizes = [2, 8, 1], strides = [1, 1, 1]} : vector<2x8x4xf32> to vector<2x8x1xf32>
    %65 = vector.extract_strided_slice %25 {offsets = [0, 2, 0], sizes = [2, 1, 8], strides = [1, 1, 1]} : vector<2x4x8xf32> to vector<2x1x8xf32>
    %66 = vector.broadcast %64 : vector<2x8x1xf32> to vector<2x8x8xf32>
    %67 = vector.broadcast %65 : vector<2x1x8xf32> to vector<2x8x8xf32>
    %68 = arith.subf %66, %67 : vector<2x8x8xf32>
    %69 = arith.mulf %68, %68 : vector<2x8x8xf32>
    %cst_18 = arith.constant 0.000000e+00 : f32
    %70 = vector.broadcast %cst_18 : f32 to vector<2x8x8xf32>
    %71 = arith.subf %70, %69 : vector<2x8x8xf32>
    %72 = math.exp %71 : vector<2x8x8xf32>
    %cst_19 = arith.constant dense<0.000000e+00> : vector<2x8xf32>
    %73 = vector.multi_reduction <add>, %72, %cst_19 [2] : vector<2x8x8xf32> to vector<2x8xf32>
    %74 = vector.shape_cast %73 : vector<2x8xf32> to vector<2x8x1xf32>
    %cst_20 = arith.constant 1.000000e-30 : f32
    %75 = vector.broadcast %cst_20 : f32 to vector<2x8x1xf32>
    %76 = arith.maximumf %74, %75 : vector<2x8x1xf32>
    %cst_21 = arith.constant 1.000000e+00 : f32
    %77 = vector.broadcast %cst_21 : f32 to vector<2x8x1xf32>
    %78 = arith.divf %77, %76 : vector<2x8x1xf32>
    %79 = vector.broadcast %78 : vector<2x8x1xf32> to vector<2x8x8xf32>
    %80 = arith.mulf %72, %79 : vector<2x8x8xf32>
    %81 = vector.extract_strided_slice %20 {offsets = [0, 0, 16], sizes = [2, 8, 8], strides = [1, 1, 1]} : vector<2x8x32xf32> to vector<2x8x8xf32>
    "tpu.trace_start"() <{level = 10 : i32, message = "bij,bjd->bid"}> : () -> ()
    %cst_22 = arith.constant dense<0.000000e+00> : vector<2x8x8xf32>
    %82 = tpu.matmul %80, %81, %cst_22 {dimension_numbers = #tpu.dot_dimension_numbers<[2], [1], [1], [2], [0, 0, 0, 1, 1, 2], [0], [0]>} : vector<2x8x8xf32>, vector<2x8x8xf32>, vector<2x8x8xf32> -> vector<2x8x8xf32>
    "tpu.trace_stop"() : () -> ()
    %83 = vector.extract_strided_slice %22 {offsets = [0, 0, 3], sizes = [2, 8, 1], strides = [1, 1, 1]} : vector<2x8x4xf32> to vector<2x8x1xf32>
    %84 = vector.extract_strided_slice %25 {offsets = [0, 3, 0], sizes = [2, 1, 8], strides = [1, 1, 1]} : vector<2x4x8xf32> to vector<2x1x8xf32>
    %85 = vector.broadcast %83 : vector<2x8x1xf32> to vector<2x8x8xf32>
    %86 = vector.broadcast %84 : vector<2x1x8xf32> to vector<2x8x8xf32>
    %87 = arith.subf %85, %86 : vector<2x8x8xf32>
    %88 = arith.mulf %87, %87 : vector<2x8x8xf32>
    %cst_23 = arith.constant 0.000000e+00 : f32
    %89 = vector.broadcast %cst_23 : f32 to vector<2x8x8xf32>
    %90 = arith.subf %89, %88 : vector<2x8x8xf32>
    %91 = math.exp %90 : vector<2x8x8xf32>
    %cst_24 = arith.constant dense<0.000000e+00> : vector<2x8xf32>
    %92 = vector.multi_reduction <add>, %91, %cst_24 [2] : vector<2x8x8xf32> to vector<2x8xf32>
    %93 = vector.shape_cast %92 : vector<2x8xf32> to vector<2x8x1xf32>
    %cst_25 = arith.constant 1.000000e-30 : f32
    %94 = vector.broadcast %cst_25 : f32 to vector<2x8x1xf32>
    %95 = arith.maximumf %93, %94 : vector<2x8x1xf32>
    %cst_26 = arith.constant 1.000000e+00 : f32
    %96 = vector.broadcast %cst_26 : f32 to vector<2x8x1xf32>
    %97 = arith.divf %96, %95 : vector<2x8x1xf32>
    %98 = vector.broadcast %97 : vector<2x8x1xf32> to vector<2x8x8xf32>
    %99 = arith.mulf %91, %98 : vector<2x8x8xf32>
    %100 = vector.extract_strided_slice %20 {offsets = [0, 0, 24], sizes = [2, 8, 8], strides = [1, 1, 1]} : vector<2x8x32xf32> to vector<2x8x8xf32>
    "tpu.trace_start"() <{level = 10 : i32, message = "bij,bjd->bid"}> : () -> ()
    %cst_27 = arith.constant dense<0.000000e+00> : vector<2x8x8xf32>
    %101 = tpu.matmul %99, %100, %cst_27 {dimension_numbers = #tpu.dot_dimension_numbers<[2], [1], [1], [2], [0, 0, 0, 1, 1, 2], [0], [0]>} : vector<2x8x8xf32>, vector<2x8x8xf32>, vector<2x8x8xf32> -> vector<2x8x8xf32>
    "tpu.trace_stop"() : () -> ()
    %102 = tpu.concatenate %44, %63, %82, %101 in 2 : vector<2x8x8xf32>, vector<2x8x8xf32>, vector<2x8x8xf32>, vector<2x8x8xf32> -> vector<2x8x32xf32>
    %103 = vector.shape_cast %102 : vector<2x8x32xf32> to vector<16x32xf32>
    %c0_28 = arith.constant 0 : index
    %c0_29 = arith.constant 0 : index
    %104 = vector.load %arg3[%c0_28, %c0_29] : memref<32x64xf32, #tpu.memory_space<vmem>>, vector<32x64xf32>
    %cst_30 = arith.constant dense<0.000000e+00> : vector<16x64xf32>
    %105 = tpu.matmul %103, %104, %cst_30 {dimension_numbers = #tpu.dot_dimension_numbers<[1], [0], [0], [1], [0, 0, 1, 1], [], []>} : vector<16x32xf32>, vector<32x64xf32>, vector<16x64xf32> -> vector<16x64xf32>
    %c0_31 = arith.constant 0 : index
    %c0_32 = arith.constant 0 : index
    %106 = vector.load %arg4[%c0_31, %c0_32] : memref<1x64xf32, #tpu.memory_space<vmem>>, vector<1x64xf32>
    %107 = vector.broadcast %106 : vector<1x64xf32> to vector<16x64xf32>
    %108 = arith.addf %105, %107 : vector<16x64xf32>
    %cst_33 = arith.constant 5.000000e-01 : f32
    %109 = vector.broadcast %cst_33 : f32 to vector<16x64xf32>
    %110 = arith.mulf %109, %108 : vector<16x64xf32>
    %cst_34 = arith.constant 4.471500e-02 : f32
    %111 = vector.broadcast %cst_34 : f32 to vector<16x64xf32>
    %112 = arith.mulf %111, %108 : vector<16x64xf32>
    %113 = arith.mulf %112, %108 : vector<16x64xf32>
    %114 = arith.mulf %113, %108 : vector<16x64xf32>
    %115 = arith.addf %108, %114 : vector<16x64xf32>
    %cst_35 = arith.constant 0.797884583 : f32
    %116 = vector.broadcast %cst_35 : f32 to vector<16x64xf32>
    %117 = arith.mulf %116, %115 : vector<16x64xf32>
    %118 = math.tanh %117 : vector<16x64xf32>
    %cst_36 = arith.constant 1.000000e+00 : f32
    %119 = vector.broadcast %cst_36 : f32 to vector<16x64xf32>
    %120 = arith.addf %119, %118 : vector<16x64xf32>
    %121 = arith.mulf %110, %120 : vector<16x64xf32>
    %c0_37 = arith.constant 0 : index
    %c0_38 = arith.constant 0 : index
    %122 = vector.load %arg5[%c0_37, %c0_38] : memref<64x32xf32, #tpu.memory_space<vmem>>, vector<64x32xf32>
    %cst_39 = arith.constant dense<0.000000e+00> : vector<16x32xf32>
    %123 = tpu.matmul %121, %122, %cst_39 {dimension_numbers = #tpu.dot_dimension_numbers<[1], [0], [0], [1], [0, 0, 1, 1], [], []>} : vector<16x64xf32>, vector<64x32xf32>, vector<16x32xf32> -> vector<16x32xf32>
    %c0_40 = arith.constant 0 : index
    %c0_41 = arith.constant 0 : index
    %124 = vector.load %arg6[%c0_40, %c0_41] : memref<1x32xf32, #tpu.memory_space<vmem>>, vector<1x32xf32>
    %125 = vector.broadcast %124 : vector<1x32xf32> to vector<16x32xf32>
    %126 = arith.addf %123, %125 : vector<16x32xf32>
    %127 = arith.addf %126, %0 : vector<16x32xf32>
    %c0_42 = arith.constant 0 : index
    %c0_43 = arith.constant 0 : index
    %128 = vector.load %arg7[%c0_42, %c0_43] : memref<16x32xf32, #tpu.memory_space<vmem>>, vector<16x32xf32>
    tpu.vector_store %arg7[%c0_42, %c0_43], %127 {strides = array<i32>} : memref<16x32xf32, #tpu.memory_space<vmem>>, vector<16x32xf32>,
    return
  }
  func.func @transform_0(%arg0: i32) -> (i32, i32) {
    %c0_i32 = arith.constant 0 : i32
    %c0_i32_0 = arith.constant 0 : i32
    %c0_i32_1 = arith.constant 0 : i32
    return %c0_i32, %c0_i32_0 : i32, i32
  }
  func.func @transform_1(%arg0: i32) -> (i32, i32) {
    %c0_i32 = arith.constant 0 : i32
    %c0_i32_0 = arith.constant 0 : i32
    %c0_i32_1 = arith.constant 0 : i32
    return %c0_i32, %c0_i32_0 : i32, i32
  }
  func.func @transform_2(%arg0: i32) -> (i32, i32) {
    %c0_i32 = arith.constant 0 : i32
    %c0_i32_0 = arith.constant 0 : i32
    %c0_i32_1 = arith.constant 0 : i32
    return %c0_i32, %c0_i32_0 : i32, i32
  }
  func.func @transform_3(%arg0: i32) -> (i32, i32) {
    %c0_i32 = arith.constant 0 : i32
    %c0_i32_0 = arith.constant 0 : i32
    %c0_i32_1 = arith.constant 0 : i32
    return %c0_i32, %c0_i32_0 : i32, i32
  }
  func.func @transform_4(%arg0: i32) -> (i32, i32) {
    %c0_i32 = arith.constant 0 : i32
    %c0_i32_0 = arith.constant 0 : i32
    %c0_i32_1 = arith.constant 0 : i32
    return %c0_i32, %c0_i32_0 : i32, i32
  }
  func.func @transform_5(%arg0: i32) -> (i32, i32) {
    %c0_i32 = arith.constant 0 : i32
    %c0_i32_0 = arith.constant 0 : i32
    %c0_i32_1 = arith.constant 0 : i32
    return %c0_i32, %c0_i32_0 : i32, i32
  }
  func.func @transform_6(%arg0: i32) -> (i32, i32) {
    %c0_i32 = arith.constant 0 : i32
    %c0_i32_0 = arith.constant 0 : i32
    %c0_i32_1 = arith.constant 0 : i32
    return %c0_i32, %c0_i32_0 : i32, i32
  }
}

</mosaic_0001>

<llo_original>
// kernel: encoder_layer_forward.1
$region0: #{encoder_layer_forward.1}
  #allocation0 [shape = 'u32[]', space=smem, size = 0x4, offset = 0x4, fixed_abs, tag = 'smem constant byte address 0x4 - core index']
  #allocation1 [shape = 'u32[72,128]{1,0:T(1,128)}', space=vmem, size = 0x9000, scoped, tag = 'internal scratch']
  %s0 = inlined_call_operand.vmem [shape: f32[16,32], index: 0, kind: input, shape index: {}]
  %s1 = inlined_call_operand.vmem [shape: f32[32,40], index: 1, kind: input, shape index: {}]
  %s2 = inlined_call_operand.vmem [shape: f32[32,64], index: 2, kind: input, shape index: {}]
  %s3 = inlined_call_operand.vmem [shape: f32[1,64], index: 3, kind: input, shape index: {}]
  %s4 = inlined_call_operand.vmem [shape: f32[64,32], index: 4, kind: input, shape index: {}]
  %s5 = inlined_call_operand.vmem [shape: f32[1,32], index: 5, kind: input, shape index: {}]
  %s6 = inlined_call_operand.hbm [shape: f32[16,32], index: 6, kind: output, shape index: {}]
  %s7 = sld [smem:[#allocation0]]
  $region34: #{encoder_layer_forward.1} parent=0
    _
  %s9 = ssub.s32 1, %s7
  %s10 = scalar_select 0, %s9, %s7
  $region1: #{encoder_layer_forward.1} parent=0
    #allocation2 [shape = 'u8[8192]{0}', space=vmem, size = 0x2000, scoped, tag = 'output window, operand 0, single buffered']
    #allocation3 [shape = 's32[1]{0}', space=sflag, size = 0x4, scoped, tag = 'scoped memory for encoder_layer_forward.1']
    %11 = vsyncpa [#allocation3], 0
    // Predicated region
    $region2: #{encoder_layer_forward.1} parent=1 // pred_check
      _
    $region3: #{encoder_layer_forward.1} parent=1 // pred_check_branch
      %13 = sbr.rel (0) target = $region5
    $region4: #{encoder_layer_forward.1} parent=1 // pred_region
      _
    $region5: #{encoder_layer_forward.1} parent=1 // pred_fallthru
      _
    // Predicated region
    $region6: #{encoder_layer_forward.1} parent=1 // pred_check
      _
    $region7: #{encoder_layer_forward.1} parent=1 // pred_check_branch
      %15 = sbr.rel (0) target = $region9
    $region8: #{encoder_layer_forward.1} parent=1 // pred_region
      _
    $region9: #{encoder_layer_forward.1} parent=1 // pred_fallthru
      _
    // Predicated region
    $region10: #{encoder_layer_forward.1} parent=1 // pred_check
      _
    $region11: #{encoder_layer_forward.1} parent=1 // pred_check_branch
      %17 = sbr.rel (0) target = $region13
    $region12: #{encoder_layer_forward.1} parent=1 // pred_region
      _
    $region13: #{encoder_layer_forward.1} parent=1 // pred_fallthru
      _
    // Predicated region
    $region14: #{encoder_layer_forward.1} parent=1 // pred_check
      _
    $region15: #{encoder_layer_forward.1} parent=1 // pred_check_branch
      %19 = sbr.rel (0) target = $region17
    $region16: #{encoder_layer_forward.1} parent=1 // pred_region
      _
    $region17: #{encoder_layer_forward.1} parent=1 // pred_fallthru
      _
    // Predicated region
    $region18: #{encoder_layer_forward.1} parent=1 // pred_check
      _
    $region19: #{encoder_layer_forward.1} parent=1 // pred_check_branch
      %21 = sbr.rel (0) target = $region21
    $region20: #{encoder_layer_forward.1} parent=1 // pred_region
      _
    $region21: #{encoder_layer_forward.1} parent=1 // pred_fallthru
      _
    // Predicated region
    $region22: #{encoder_layer_forward.1} parent=1 // pred_check
      _
    $region23: #{encoder_layer_forward.1} parent=1 // pred_check_branch
      %23 = sbr.rel (0) target = $region25
    $region24: #{encoder_layer_forward.1} parent=1 // pred_region
      _
    $region25: #{encoder_layer_forward.1} parent=1 // pred_fallthru
      _
    %v24 = vld [vmem:[%s0] sm:$0xff]
    %v25 = vld [vmem:[%s0 + $0x8] sm:$0xff]
    %vm26 = vcmask 261120
    %v27 = vsel %vm26, %v24, 0.0
    %28 = vadd.xlane.f32.xlu0 %v27
    %v29 = vpop.xlane.xlu0 %28
    %v30 = vsel %vm26, %v25, 0.0
    %31 = vadd.xlane.f32.xlu0 %v30
    %v32 = vpop.xlane.xlu0 %31
    %v33 = vrcp.pop 32.0
    %v34 = vmul.f32 32.0, %v33
    %v35 = vsub.f32 1.0, %v34
    %v36 = vmul.f32 %v33, %v35
    %v37 = vadd.f32 %v33, %v36
    %vm38 = vweird.f32 %v33
    %v39 = vsel %vm38, %v33, %v37
    %v40 = vmul.f32 %v29, %v39
    %v41 = vmul.f32 %v32, %v39
    %v42 = vsub.f32 %v24, %v40
    %v43 = vsub.f32 %v25, %v41
    %v44 = vmul.f32 %v42, %v42
    %v45 = vmul.f32 %v43, %v43
    %v46 = vsel %vm26, %v44, 0.0
    %47 = vadd.xlane.f32.xlu0 %v46
    %v48 = vpop.xlane.xlu0 %47
    %v49 = vsel %vm26, %v45, 0.0
    %50 = vadd.xlane.f32.xlu0 %v49
    %v51 = vpop.xlane.xlu0 %50
    %v52 = vmul.f32 %v48, %v39
    %v53 = vmul.f32 %v51, %v39
    %v54 = vadd.f32 %v52, 1e-05
    %v55 = vadd.f32 %v53, 1e-05
    %v56 = vrsqrt.pop %v54
    %v57 = vmul.f32 %v56, %v54
    %v58 = vmul.f32 %v57, %v56
    %v59 = vmul.f32 0.5, %v58
    %v60 = vsub.f32 1.5, %v59
    %v61 = vmul.f32 %v56, %v60
    %vm62 = vweird.f32 %v54
    %vm63 = vweird.f32 %v56
    %vm64 = vmor %vm62, %vm63
    %v65 = vsel %vm64, %v56, %v61
    %v66 = vrsqrt.pop %v55
    %v67 = vmul.f32 %v66, %v55
    %v68 = vmul.f32 %v67, %v66
    %v69 = vmul.f32 0.5, %v68
    %v70 = vsub.f32 1.5, %v69
    %v71 = vmul.f32 %v66, %v70
    %vm72 = vweird.f32 %v55
    %vm73 = vweird.f32 %v66
    %vm74 = vmor %vm72, %vm73
    %v75 = vsel %vm74, %v66, %v71
    %v76 = vmul.f32 %v42, %v65
    %v77 = vmul.f32 %v43, %v75
    %v78 = vld [vmem:[%s1] sm:$0xff]
    %v79 = vld [vmem:[%s1 + $0x8] sm:$0xff]
    %v80 = vld [vmem:[%s1 + $0x10] sm:$0xff]
    %v81 = vld [vmem:[%s1 + $0x18] sm:$0xff]
    %v83 = vsel %vm26, %v76, 0
    %v86 = vsel %vm26, %v77, 0
    %88 = vmatpush.msra.mxu0 0.0
    %89 = vmatpush.msra.mxu0 0.0
    %90 = vmatpush.msra.mxu0 0.0
    %91 = vmatpush.msra.mxu0 0.0
    %92 = vmatpush.msra.mxu0 0.0
    %93 = vmatpush.msra.mxu0 0.0
    %94 = vmatpush.msra.mxu0 0.0
    %95 = vmatpush.msra.mxu0 0.0
    %96 = vmatpush.msra.mxu0 0.0
    %97 = vmatpush.msra.mxu0 0.0
    %98 = vmatpush.msra.mxu0 0.0
    %99 = vmatpush.msra.mxu0 0.0
    %100 = vmatpush.msra.mxu0 %v81
    %101 = vmatpush.msra.mxu0 %v80
    %102 = vmatpush.msra.mxu0 %v79
    %103 = vmatpush.msra.mxu0 %v78
    %104 = vmatmul.f32.gmra.mxu0 %v83
    %v105 = vpop.f32.mrf.mxu0
    %v106 = vadd.f32 0.0, %v105
    %107 = vmatmul.f32.gmra.mxu0 %v86
    %v108 = vpop.f32.mrf.mxu0
    %v109 = vadd.f32 0.0, %v108
    %110 = vdwg.mxu0
    %113 = vrot.lane.b32.xlu0 %v106, 92
    %v114 = vpop.permute.xlu0 %113
    %115 = vrot.lane.b32.xlu0 %v109, 92
    %v116 = vpop.permute.xlu0 %115
    %119 = vxpose.xlu0.b32.start [1/16] %v114, 128
    %120 = vxpose.xlu0.b32.cont [2/16] 0.0, 128
    %121 = vxpose.xlu0.b32.cont [3/16] 0.0, 128
    %122 = vxpose.xlu0.b32.cont [4/16] 0.0, 128
    %123 = vxpose.xlu0.b32.cont [5/16] 0.0, 128
    %124 = vxpose.xlu0.b32.cont [6/16] 0.0, 128
    %125 = vxpose.xlu0.b32.cont [7/16] 0.0, 128
    %126 = vxpose.xlu0.b32.cont [8/16] 0.0, 128
    %127 = vxpose.xlu0.b32.cont [9/16] 0.0, 128
    %128 = vxpose.xlu0.b32.cont [10/16] 0.0, 128
    %129 = vxpose.xlu0.b32.cont [11/16] 0.0, 128
    %130 = vxpose.xlu0.b32.cont [12/16] 0.0, 128
    %131 = vxpose.xlu0.b32.cont [13/16] 0.0, 128
    %132 = vxpose.xlu0.b32.cont [14/16] 0.0, 128
    %133 = vxpose.xlu0.b32.cont [15/16] 0.0, 128
    %134 = vxpose.xlu0.b32.end [16/16] 0.0, 128
    %v135 = vpop.trf.xlu0
    %v136 = vpop.trf.xlu0
    %v137 = vpop.trf.xlu0
    %v138 = vpop.trf.xlu0
    %v139 = vpop.trf.xlu0
    %v140 = vpop.trf.xlu0
    %v141 = vpop.trf.xlu0
    %v142 = vpop.trf.xlu0
    %v143 = vpop.trf.xlu0
    %v144 = vpop.trf.xlu0
    %v145 = vpop.trf.xlu0
    %v146 = vpop.trf.xlu0
    %v147 = vpop.trf.xlu0
    %v148 = vpop.trf.xlu0
    %v149 = vpop.trf.xlu0
    %v150 = vpop.trf.xlu0
    %151 = vxpose.xlu0.b32.start [1/16] %v116, 128
    %152 = vxpose.xlu0.b32.cont [2/16] 0.0, 128
    %153 = vxpose.xlu0.b32.cont [3/16] 0.0, 128
    %154 = vxpose.xlu0.b32.cont [4/16] 0.0, 128
    %155 = vxpose.xlu0.b32.cont [5/16] 0.0, 128
    %156 = vxpose.xlu0.b32.cont [6/16] 0.0, 128
    %157 = vxpose.xlu0.b32.cont [7/16] 0.0, 128
    %158 = vxpose.xlu0.b32.cont [8/16] 0.0, 128
    %159 = vxpose.xlu0.b32.cont [9/16] 0.0, 128
    %160 = vxpose.xlu0.b32.cont [10/16] 0.0, 128
    %161 = vxpose.xlu0.b32.cont [11/16] 0.0, 128
    %162 = vxpose.xlu0.b32.cont [12/16] 0.0, 128
    %163 = vxpose.xlu0.b32.cont [13/16] 0.0, 128
    %164 = vxpose.xlu0.b32.cont [14/16] 0.0, 128
    %165 = vxpose.xlu0.b32.cont [15/16] 0.0, 128
    %166 = vxpose.xlu0.b32.end [16/16] 0.0, 128
    %v167 = vpop.trf.xlu0
    %v168 = vpop.trf.xlu0
    %v169 = vpop.trf.xlu0
    %v170 = vpop.trf.xlu0
    %v171 = vpop.trf.xlu0
    %v172 = vpop.trf.xlu0
    %v173 = vpop.trf.xlu0
    %v174 = vpop.trf.xlu0
    %v175 = vpop.trf.xlu0
    %v176 = vpop.trf.xlu0
    %v177 = vpop.trf.xlu0
    %v178 = vpop.trf.xlu0
    %v179 = vpop.trf.xlu0
    %v180 = vpop.trf.xlu0
    %v181 = vpop.trf.xlu0
    %v182 = vpop.trf.xlu0
    %183 = vset.pattern.permute.xlu0 32
    %184 = vperm.xlu0 %183, %v106
    %v185 = vpop.permute.xlu0 %184
    %187 = vset.pattern.permute.xlu0 32
    %188 = vperm.xlu0 %187, %v109
    %v189 = vpop.permute.xlu0 %188
    %v191 = vperm.slane %v135, 0
    %v192 = vperm.slane %v167, 0
    %v193 = vsub.f32 %v185, %v191
    %v194 = vsub.f32 %v189, %v192
    %v195 = vmul.f32 %v193, %v193
    %v196 = vmul.f32 %v194, %v194
    %v197 = vsub.f32 0.0, %v195
    %v198 = vsub.f32 0.0, %v196
    %v199 = vmul.f32 %v197, 1.442695
    %v200 = vpow.pop %v199
    %v201 = vmul.f32 %v198, 1.442695
    %v202 = vpow.pop %v201
    %vm203 = vcmask 64512
    %v204 = vsel %vm203, %v200, 0.0
    %205 = vadd.xlane.f32.xlu0 %v204
    %v206 = vpop.xlane.xlu0 %205
    %v207 = vsel %vm203, %v202, 0.0
    %208 = vadd.xlane.f32.xlu0 %v207
    %v209 = vpop.xlane.xlu0 %208
    %v210 = vmax.f32 %v206, 1e-30
    %v211 = vmax.f32 %v209, 1e-30
    %v212 = vrcp.pop %v210
    %v213 = vmul.f32 %v210, %v212
    %v214 = vsub.f32 1.0, %v213
    %v215 = vmul.f32 %v212, %v214
    %v216 = vadd.f32 %v212, %v215
    %vm217 = vweird.f32 %v210
    %vm218 = vweird.f32 %v212
    %vm219 = vmor %vm217, %vm218
    %v220 = vsel %vm219, %v212, %v216
    %v221 = vand.u32 2147483647, %v210
    %vm222 = vcmp.eq.f32.partialorder %v221, 8.507059e+37
    %v223 = vand.u32 %v210, 2147483648
    %v224 = vor.u32 1.1754944e-38, %v223
    %v225 = vsel %vm222, %v224, %v220
    %v226 = vmul.f32 1.0, %v225
    %v227 = vrcp.pop %v211
    %v228 = vmul.f32 %v211, %v227
    %v229 = vsub.f32 1.0, %v228
    %v230 = vmul.f32 %v227, %v229
    %v231 = vadd.f32 %v227, %v230
    %vm232 = vweird.f32 %v211
    %vm233 = vweird.f32 %v227
    %vm234 = vmor %vm232, %vm233
    %v235 = vsel %vm234, %v227, %v231
    %v236 = vand.u32 2147483647, %v211
    %vm237 = vcmp.eq.f32.partialorder %v236, 8.507059e+37
    %v238 = vand.u32 %v211, 2147483648
    %v239 = vor.u32 1.1754944e-38, %v238
    %v240 = vsel %vm237, %v239, %v235
    %v241 = vmul.f32 1.0, %v240
    %v242 = vmul.f32 %v200, %v226
    %v243 = vmul.f32 %v202, %v241
    %v245 = vsel %vm203, %v242, 0
    %247 = vmatpush.msra.mxu0 0.0
    %248 = vmatpush.msra.mxu0 0.0
    %249 = vmatpush.msra.mxu0 0.0
    %250 = vmatpush.msra.mxu0 0.0
    %251 = vmatpush.msra.mxu0 0.0
    %252 = vmatpush.msra.mxu0 0.0
    %253 = vmatpush.msra.mxu0 0.0
    %254 = vmatpush.msra.mxu0 0.0
    %255 = vmatpush.msra.mxu0 0.0
    %256 = vmatpush.msra.mxu0 0.0
    %257 = vmatpush.msra.mxu0 0.0
    %258 = vmatpush.msra.mxu0 0.0
    %259 = vmatpush.msra.mxu0 0.0
    %260 = vmatpush.msra.mxu0 0.0
    %261 = vmatpush.msra.mxu0 0.0
    %262 = vmatpush.msra.mxu0 %v106
    %263 = vmatmul.f32.gmra.mxu0 %v245
    %v264 = vpop.f32.mrf.mxu0
    %v265 = vadd.f32 0.0, %v264
    %266 = vdwg.mxu0
    %v268 = vsel %vm203, %v243, 0
    %270 = vmatpush.msra.mxu0 0.0
    %271 = vmatpush.msra.mxu0 0.0
    %272 = vmatpush.msra.mxu0 0.0
    %273 = vmatpush.msra.mxu0 0.0
    %274 = vmatpush.msra.mxu0 0.0
    %275 = vmatpush.msra.mxu0 0.0
    %276 = vmatpush.msra.mxu0 0.0
    %277 = vmatpush.msra.mxu0 0.0
    %278 = vmatpush.msra.mxu0 0.0
    %279 = vmatpush.msra.mxu0 0.0
    %280 = vmatpush.msra.mxu0 0.0
    %281 = vmatpush.msra.mxu0 0.0
    %282 = vmatpush.msra.mxu0 0.0
    %283 = vmatpush.msra.mxu0 0.0
    %284 = vmatpush.msra.mxu0 0.0
    %285 = vmatpush.msra.mxu0 %v109
    %286 = vmatmul.f32.gmra.mxu0 %v268
    %v287 = vpop.f32.mrf.mxu0
    %v288 = vadd.f32 0.0, %v287
    %289 = vdwg.mxu0
    %290 = vset.pattern.permute.xlu0 33
    %291 = vperm.xlu0 %290, %v106
    %v292 = vpop.permute.xlu0 %291
    %294 = vset.pattern.permute.xlu0 33
    %295 = vperm.xlu0 %294, %v109
    %v296 = vpop.permute.xlu0 %295
    %v298 = vperm.slane %v135, 1
    %v299 = vperm.slane %v167, 1
    %v300 = vsub.f32 %v292, %v298
    %v301 = vsub.f32 %v296, %v299
    %v302 = vmul.f32 %v300, %v300
    %v303 = vmul.f32 %v301, %v301
    %v304 = vsub.f32 0.0, %v302
    %v305 = vsub.f32 0.0, %v303
    %v306 = vmul.f32 %v304, 1.442695
    %v307 = vpow.pop %v306
    %v308 = vmul.f32 %v305, 1.442695
    %v309 = vpow.pop %v308
    %v310 = vsel %vm203, %v307, 0.0
    %311 = vadd.xlane.f32.xlu0 %v310
    %v312 = vpop.xlane.xlu0 %311
    %v313 = vsel %vm203, %v309, 0.0
    %314 = vadd.xlane.f32.xlu0 %v313
    %v315 = vpop.xlane.xlu0 %314
    %v316 = vmax.f32 %v312, 1e-30
    %v317 = vmax.f32 %v315, 1e-30
    %v318 = vrcp.pop %v316
    %v319 = vmul.f32 %v316, %v318
    %v320 = vsub.f32 1.0, %v319
    %v321 = vmul.f32 %v318, %v320
    %v322 = vadd.f32 %v318, %v321
    %vm323 = vweird.f32 %v316
    %vm324 = vweird.f32 %v318
    %vm325 = vmor %vm323, %vm324
    %v326 = vsel %vm325, %v318, %v322
    %v327 = vand.u32 2147483647, %v316
    %vm328 = vcmp.eq.f32.partialorder %v327, 8.507059e+37
    %v329 = vand.u32 %v316, 2147483648
    %v330 = vor.u32 1.1754944e-38, %v329
    %v331 = vsel %vm328, %v330, %v326
    %v332 = vmul.f32 1.0, %v331
    %v333 = vrcp.pop %v317
    %v334 = vmul.f32 %v317, %v333
    %v335 = vsub.f32 1.0, %v334
    %v336 = vmul.f32 %v333, %v335
    %v337 = vadd.f32 %v333, %v336
    %vm338 = vweird.f32 %v317
    %vm339 = vweird.f32 %v333
    %vm340 = vmor %vm338, %vm339
    %v341 = vsel %vm340, %v333, %v337
    %v342 = vand.u32 2147483647, %v317
    %vm343 = vcmp.eq.f32.partialorder %v342, 8.507059e+37
    %v344 = vand.u32 %v317, 2147483648
    %v345 = vor.u32 1.1754944e-38, %v344
    %v346 = vsel %vm343, %v345, %v341
    %v347 = vmul.f32 1.0, %v346
    %v348 = vmul.f32 %v307, %v332
    %v349 = vmul.f32 %v309, %v347
    %350 = vrot.lane.b32.xlu0 %v106, 120
    %v351 = vpop.permute.xlu0 %350
    %v354 = vsel %vm203, %v348, 0
    %356 = vmatpush.msra.mxu0 0.0
    %357 = vmatpush.msra.mxu0 0.0
    %358 = vmatpush.msra.mxu0 0.0
    %359 = vmatpush.msra.mxu0 0.0
    %360 = vmatpush.msra.mxu0 0.0
    %361 = vmatpush.msra.mxu0 0.0
    %362 = vmatpush.msra.mxu0 0.0
    %363 = vmatpush.msra.mxu0 0.0
    %364 = vmatpush.msra.mxu0 0.0
    %365 = vmatpush.msra.mxu0 0.0
    %366 = vmatpush.msra.mxu0 0.0
    %367 = vmatpush.msra.mxu0 0.0
    %368 = vmatpush.msra.mxu0 0.0
    %369 = vmatpush.msra.mxu0 0.0
    %370 = vmatpush.msra.mxu0 0.0
    %371 = vmatpush.msra.mxu0 %v351
    %372 = vmatmul.f32.gmra.mxu0 %v354
    %v373 = vpop.f32.mrf.mxu0
    %v374 = vadd.f32 0.0, %v373
    %375 = vdwg.mxu0
    %376 = vrot.lane.b32.xlu0 %v109, 120
    %v377 = vpop.permute.xlu0 %376
    %v380 = vsel %vm203, %v349, 0
    %382 = vmatpush.msra.mxu0 0.0
    %383 = vmatpush.msra.mxu0 0.0
    %384 = vmatpush.msra.mxu0 0.0
    %385 = vmatpush.msra.mxu0 0.0
    %386 = vmatpush.msra.mxu0 0.0
    %387 = vmatpush.msra.mxu0 0.0
    %388 = vmatpush.msra.mxu0 0.0
    %389 = vmatpush.msra.mxu0 0.0
    %390 = vmatpush.msra.mxu0 0.0
    %391 = vmatpush.msra.mxu0 0.0
    %392 = vmatpush.msra.mxu0 0.0
    %393 = vmatpush.msra.mxu0 0.0
    %394 = vmatpush.msra.mxu0 0.0
    %395 = vmatpush.msra.mxu0 0.0
    %396 = vmatpush.msra.mxu0 0.0
    %397 = vmatpush.msra.mxu0 %v377
    %398 = vmatmul.f32.gmra.mxu0 %v380
    %v399 = vpop.f32.mrf.mxu0
    %v400 = vadd.f32 0.0, %v399
    %401 = vdwg.mxu0
    %402 = vset.pattern.permute.xlu0 34
    %403 = vperm.xlu0 %402, %v106
    %v404 = vpop.permute.xlu0 %403
    %406 = vset.pattern.permute.xlu0 34
    %407 = vperm.xlu0 %406, %v109
    %v408 = vpop.permute.xlu0 %407
    %v410 = vperm.slane %v135, 2
    %v411 = vperm.slane %v167, 2
    %v412 = vsub.f32 %v404, %v410
    %v413 = vsub.f32 %v408, %v411
    %v414 = vmul.f32 %v412, %v412
    %v415 = vmul.f32 %v413, %v413
    %v416 = vsub.f32 0.0, %v414
    %v417 = vsub.f32 0.0, %v415
    %v418 = vmul.f32 %v416, 1.442695
    %v419 = vpow.pop %v418
    %v420 = vmul.f32 %v417, 1.442695
    %v421 = vpow.pop %v420
    %v422 = vsel %vm203, %v419, 0.0
    %423 = vadd.xlane.f32.xlu0 %v422
    %v424 = vpop.xlane.xlu0 %423
    %v425 = vsel %vm203, %v421, 0.0
    %426 = vadd.xlane.f32.xlu0 %v425
    %v427 = vpop.xlane.xlu0 %426
    %v428 = vmax.f32 %v424, 1e-30
    %v429 = vmax.f32 %v427, 1e-30
    %v430 = vrcp.pop %v428
    %v431 = vmul.f32 %v428, %v430
    %v432 = vsub.f32 1.0, %v431
    %v433 = vmul.f32 %v430, %v432
    %v434 = vadd.f32 %v430, %v433
    %vm435 = vweird.f32 %v428
    %vm436 = vweird.f32 %v430
    %vm437 = vmor %vm435, %vm436
    %v438 = vsel %vm437, %v430, %v434
    %v439 = vand.u32 2147483647, %v428
    %vm440 = vcmp.eq.f32.partialorder %v439, 8.507059e+37
    %v441 = vand.u32 %v428, 2147483648
    %v442 = vor.u32 1.1754944e-38, %v441
    %v443 = vsel %vm440, %v442, %v438
    %v444 = vmul.f32 1.0, %v443
    %v445 = vrcp.pop %v429
    %v446 = vmul.f32 %v429, %v445
    %v447 = vsub.f32 1.0, %v446
    %v448 = vmul.f32 %v445, %v447
    %v449 = vadd.f32 %v445, %v448
    %vm450 = vweird.f32 %v429
    %vm451 = vweird.f32 %v445
    %vm452 = vmor %vm450, %vm451
    %v453 = vsel %vm452, %v445, %v449
    %v454 = vand.u32 2147483647, %v429
    %vm455 = vcmp.eq.f32.partialorder %v454, 8.507059e+37
    %v456 = vand.u32 %v429, 2147483648
    %v457 = vor.u32 1.1754944e-38, %v456
    %v458 = vsel %vm455, %v457, %v453
    %v459 = vmul.f32 1.0, %v458
    %v460 = vmul.f32 %v419, %v444
    %v461 = vmul.f32 %v421, %v459
    %462 = vrot.lane.b32.xlu0 %v106, 112
    %v463 = vpop.permute.xlu0 %462
    %v466 = vsel %vm203, %v460, 0
    %468 = vmatpush.msra.mxu0 0.0
    %469 = vmatpush.msra.mxu0 0.0
    %470 = vmatpush.msra.mxu0 0.0
    %471 = vmatpush.msra.mxu0 0.0
    %472 = vmatpush.msra.mxu0 0.0
    %473 = vmatpush.msra.mxu0 0.0
    %474 = vmatpush.msra.mxu0 0.0
    %475 = vmatpush.msra.mxu0 0.0
    %476 = vmatpush.msra.mxu0 0.0
    %477 = vmatpush.msra.mxu0 0.0
    %478 = vmatpush.msra.mxu0 0.0
    %479 = vmatpush.msra.mxu0 0.0
    %480 = vmatpush.msra.mxu0 0.0
    %481 = vmatpush.msra.mxu0 0.0
    %482 = vmatpush.msra.mxu0 0.0
    %483 = vmatpush.msra.mxu0 %v463
    %484 = vmatmul.f32.gmra.mxu0 %v466
    %v485 = vpop.f32.mrf.mxu0
    %v486 = vadd.f32 0.0, %v485
    %487 = vdwg.mxu0
    %488 = vrot.lane.b32.xlu0 %v109, 112
    %v489 = vpop.permute.xlu0 %488
    %v492 = vsel %vm203, %v461, 0
    %494 = vmatpush.msra.mxu0 0.0
    %495 = vmatpush.msra.mxu0 0.0
    %496 = vmatpush.msra.mxu0 0.0
    %497 = vmatpush.msra.mxu0 0.0
    %498 = vmatpush.msra.mxu0 0.0
    %499 = vmatpush.msra.mxu0 0.0
    %500 = vmatpush.msra.mxu0 0.0
    %501 = vmatpush.msra.mxu0 0.0
    %502 = vmatpush.msra.mxu0 0.0
    %503 = vmatpush.msra.mxu0 0.0
    %504 = vmatpush.msra.mxu0 0.0
    %505 = vmatpush.msra.mxu0 0.0
    %506 = vmatpush.msra.mxu0 0.0
    %507 = vmatpush.msra.mxu0 0.0
    %508 = vmatpush.msra.mxu0 0.0
    %509 = vmatpush.msra.mxu0 %v489
    %510 = vmatmul.f32.gmra.mxu0 %v492
    %v511 = vpop.f32.mrf.mxu0
    %v512 = vadd.f32 0.0, %v511
    %513 = vdwg.mxu0
    %514 = vset.pattern.permute.xlu0 35
    %515 = vperm.xlu0 %514, %v106
    %v516 = vpop.permute.xlu0 %515
    %518 = vset.pattern.permute.xlu0 35
    %519 = vperm.xlu0 %518, %v109
    %v520 = vpop.permute.xlu0 %519
    %v522 = vperm.slane %v135, 3
    %v523 = vperm.slane %v167, 3
    %v524 = vsub.f32 %v516, %v522
    %v525 = vsub.f32 %v520, %v523
    %v526 = vmul.f32 %v524, %v524
    %v527 = vmul.f32 %v525, %v525
    %v528 = vsub.f32 0.0, %v526
    %v529 = vsub.f32 0.0, %v527
    %v530 = vmul.f32 %v528, 1.442695
    %v531 = vpow.pop %v530
    %v532 = vmul.f32 %v529, 1.442695
    %v533 = vpow.pop %v532
    %v534 = vsel %vm203, %v531, 0.0
    %535 = vadd.xlane.f32.xlu0 %v534
    %v536 = vpop.xlane.xlu0 %535
    %v537 = vsel %vm203, %v533, 0.0
    %538 = vadd.xlane.f32.xlu0 %v537
    %v539 = vpop.xlane.xlu0 %538
    %v540 = vmax.f32 %v536, 1e-30
    %v541 = vmax.f32 %v539, 1e-30
    %v542 = vrcp.pop %v540
    %v543 = vmul.f32 %v540, %v542
    %v544 = vsub.f32 1.0, %v543
    %v545 = vmul.f32 %v542, %v544
    %v546 = vadd.f32 %v542, %v545
    %vm547 = vweird.f32 %v540
    %vm548 = vweird.f32 %v542
    %vm549 = vmor %vm547, %vm548
    %v550 = vsel %vm549, %v542, %v546
    %v551 = vand.u32 2147483647, %v540
    %vm552 = vcmp.eq.f32.partialorder %v551, 8.507059e+37
    %v553 = vand.u32 %v540, 2147483648
    %v554 = vor.u32 1.1754944e-38, %v553
    %v555 = vsel %vm552, %v554, %v550
    %v556 = vmul.f32 1.0, %v555
    %v557 = vrcp.pop %v541
    %v558 = vmul.f32 %v541, %v557
    %v559 = vsub.f32 1.0, %v558
    %v560 = vmul.f32 %v557, %v559
    %v561 = vadd.f32 %v557, %v560
    %vm562 = vweird.f32 %v541
    %vm563 = vweird.f32 %v557
    %vm564 = vmor %vm562, %vm563
    %v565 = vsel %vm564, %v557, %v561
    %v566 = vand.u32 2147483647, %v541
    %vm567 = vcmp.eq.f32.partialorder %v566, 8.507059e+37
    %v568 = vand.u32 %v541, 2147483648
    %v569 = vor.u32 1.1754944e-38, %v568
    %v570 = vsel %vm567, %v569, %v565
    %v571 = vmul.f32 1.0, %v570
    %v572 = vmul.f32 %v531, %v556
    %v573 = vmul.f32 %v533, %v571
    %574 = vrot.lane.b32.xlu0 %v106, 104
    %v575 = vpop.permute.xlu0 %574
    %v578 = vsel %vm203, %v572, 0
    %580 = vmatpush.msra.mxu0 0.0
    %581 = vmatpush.msra.mxu0 0.0
    %582 = vmatpush.msra.mxu0 0.0
    %583 = vmatpush.msra.mxu0 0.0
    %584 = vmatpush.msra.mxu0 0.0
    %585 = vmatpush.msra.mxu0 0.0
    %586 = vmatpush.msra.mxu0 0.0
    %587 = vmatpush.msra.mxu0 0.0
    %588 = vmatpush.msra.mxu0 0.0
    %589 = vmatpush.msra.mxu0 0.0
    %590 = vmatpush.msra.mxu0 0.0
    %591 = vmatpush.msra.mxu0 0.0
    %592 = vmatpush.msra.mxu0 0.0
    %593 = vmatpush.msra.mxu0 0.0
    %594 = vmatpush.msra.mxu0 0.0
    %595 = vmatpush.msra.mxu0 %v575
    %596 = vmatmul.f32.gmra.mxu0 %v578
    %v597 = vpop.f32.mrf.mxu0
    %v598 = vadd.f32 0.0, %v597
    %599 = vdwg.mxu0
    %600 = vrot.lane.b32.xlu0 %v109, 104
    %v601 = vpop.permute.xlu0 %600
    %v604 = vsel %vm203, %v573, 0
    %606 = vmatpush.msra.mxu0 0.0
    %607 = vmatpush.msra.mxu0 0.0
    %608 = vmatpush.msra.mxu0 0.0
    %609 = vmatpush.msra.mxu0 0.0
    %610 = vmatpush.msra.mxu0 0.0
    %611 = vmatpush.msra.mxu0 0.0
    %612 = vmatpush.msra.mxu0 0.0
    %613 = vmatpush.msra.mxu0 0.0
    %614 = vmatpush.msra.mxu0 0.0
    %615 = vmatpush.msra.mxu0 0.0
    %616 = vmatpush.msra.mxu0 0.0
    %617 = vmatpush.msra.mxu0 0.0
    %618 = vmatpush.msra.mxu0 0.0
    %619 = vmatpush.msra.mxu0 0.0
    %620 = vmatpush.msra.mxu0 0.0
    %621 = vmatpush.msra.mxu0 %v601
    %622 = vmatmul.f32.gmra.mxu0 %v604
    %v623 = vpop.f32.mrf.mxu0
    %v624 = vadd.f32 0.0, %v623
    %625 = vdwg.mxu0
    %628 = vrot.lane.b32.xlu0 %v374, 8
    %v629 = vpop.permute.xlu0 %628
    %630 = vrot.lane.b32.xlu0 %v400, 8
    %v631 = vpop.permute.xlu0 %630
    %636 = vrot.lane.b32.xlu0 %v486, 16
    %v637 = vpop.permute.xlu0 %636
    %638 = vrot.lane.b32.xlu0 %v512, 16
    %v639 = vpop.permute.xlu0 %638
    %644 = vrot.lane.b32.xlu0 %v598, 24
    %v645 = vpop.permute.xlu0 %644
    %646 = vrot.lane.b32.xlu0 %v624, 24
    %v647 = vpop.permute.xlu0 %646
    %v650 = vsel %vm203, %v265, %v629
    %v651 = vsel %vm203, %v288, %v631
    %vm652 = vcmask 130048
    %v653 = vsel %vm652, %v650, %v637
    %v654 = vsel %vm652, %v651, %v639
    %vm655 = vcmask 195584
    %v656 = vsel %vm655, %v653, %v645
    %v657 = vsel %vm655, %v654, %v647
    %v658 = vld [vmem:[%s2] sm:$0xff]
    %v659 = vld [vmem:[%s2 + $0x8] sm:$0xff]
    %v660 = vld [vmem:[%s2 + $0x10] sm:$0xff]
    %v661 = vld [vmem:[%s2 + $0x18] sm:$0xff]
    %v662 = vld [vmem:[%s3] sm:$0x1]
    %v664 = vperm.slane %v662, 0
    %v667 = vsel %vm26, %v656, 0
    %v670 = vsel %vm26, %v657, 0
    %672 = vmatpush.msra.mxu0 0.0
    %673 = vmatpush.msra.mxu0 0.0
    %674 = vmatpush.msra.mxu0 0.0
    %675 = vmatpush.msra.mxu0 0.0
    %676 = vmatpush.msra.mxu0 0.0
    %677 = vmatpush.msra.mxu0 0.0
    %678 = vmatpush.msra.mxu0 0.0
    %679 = vmatpush.msra.mxu0 0.0
    %680 = vmatpush.msra.mxu0 0.0
    %681 = vmatpush.msra.mxu0 0.0
    %682 = vmatpush.msra.mxu0 0.0
    %683 = vmatpush.msra.mxu0 0.0
    %684 = vmatpush.msra.mxu0 %v661
    %685 = vmatpush.msra.mxu0 %v660
    %686 = vmatpush.msra.mxu0 %v659
    %687 = vmatpush.msra.mxu0 %v658
    %688 = vmatmul.f32.gmra.mxu0 %v667
    %v689 = vpop.f32.mrf.mxu0
    %v690 = vadd.f32 %v664, %v689
    %691 = vmatmul.f32.gmra.mxu0 %v670
    %v692 = vpop.f32.mrf.mxu0
    %v693 = vadd.f32 %v664, %v692
    %694 = vdwg.mxu0
    %v695 = vmul.f32 %v690, 0.5
    %v696 = vmul.f32 %v693, 0.5
    %v697 = vmul.f32 %v690, 0.044715
    %v698 = vmul.f32 %v693, 0.044715
    %v699 = vmul.f32 %v697, %v690
    %v700 = vmul.f32 %v698, %v693
    %v701 = vmul.f32 %v699, %v690
    %v702 = vmul.f32 %v700, %v693
    %v703 = vadd.f32 %v690, %v701
    %v704 = vadd.f32 %v693, %v702
    %v705 = vmul.f32 %v703, 0.7978846
    %v706 = vmul.f32 %v704, 0.7978846
    %v707 = vtanh.pop %v705
    %v708 = vtanh.pop %v706
    %v709 = vadd.f32 %v707, 1.0
    %v710 = vadd.f32 %v708, 1.0
    %v711 = vmul.f32 %v695, %v709
    %v712 = vmul.f32 %v696, %v710
    %v713 = vld [vmem:[%s4] sm:$0xff]
    %v714 = vld [vmem:[%s4 + $0x8] sm:$0xff]
    %v715 = vld [vmem:[%s4 + $0x10] sm:$0xff]
    %v716 = vld [vmem:[%s4 + $0x18] sm:$0xff]
    %v717 = vld [vmem:[%s4 + $0x20] sm:$0xff]
    %v718 = vld [vmem:[%s4 + $0x28] sm:$0xff]
    %v719 = vld [vmem:[%s4 + $0x30] sm:$0xff]
    %v720 = vld [vmem:[%s4 + $0x38] sm:$0xff]
    %v721 = vld [vmem:[%s5] sm:$0x1]
    %v723 = vperm.slane %v721, 0
    %vm725 = vcmask 523264
    %v727 = vsel %vm725, %v711, 0
    %v730 = vsel %vm725, %v712, 0
    %732 = vmatpush.msra.mxu0 0.0
    %733 = vmatpush.msra.mxu0 0.0
    %734 = vmatpush.msra.mxu0 0.0
    %735 = vmatpush.msra.mxu0 0.0
    %736 = vmatpush.msra.mxu0 0.0
    %737 = vmatpush.msra.mxu0 0.0
    %738 = vmatpush.msra.mxu0 0.0
    %739 = vmatpush.msra.mxu0 0.0
    %740 = vmatpush.msra.mxu0 %v720
    %741 = vmatpush.msra.mxu0 %v719
    %742 = vmatpush.msra.mxu0 %v718
    %743 = vmatpush.msra.mxu0 %v717
    %744 = vmatpush.msra.mxu0 %v716
    %745 = vmatpush.msra.mxu0 %v715
    %746 = vmatpush.msra.mxu0 %v714
    %747 = vmatpush.msra.mxu0 %v713
    %748 = vmatmul.f32.gmra.mxu0 %v727
    %v749 = vpop.f32.mrf.mxu0
    %v750 = vadd.f32 %v723, %v749
    %751 = vmatmul.f32.gmra.mxu0 %v730
    %v752 = vpop.f32.mrf.mxu0
    %v753 = vadd.f32 %v723, %v752
    %754 = vdwg.mxu0
    %v755 = vadd.f32 %v750, %v24
    %v756 = vadd.f32 %v753, %v25
    %757 = vst.msk [vmem:[#allocation2] sm:$0xff] %vm26, %v755
    %758 = vst.msk [vmem:[#allocation2 + $0x8] sm:$0xff] %vm26, %v756
    // Predicated region
    $region26: #{encoder_layer_forward.1} parent=1 // pred_check
      _
    $region27: #{encoder_layer_forward.1} parent=1 // pred_check_branch
      %760 = sbr.rel (0) target = $region29
    $region28: #{encoder_layer_forward.1} parent=1 // pred_region
      %762 = vsyncadd [#allocation3], 0
      %s763 = sshll.u32 [#allocation2], 4
      %s764 = int_to_ptr.vmem [resolvable:$true] %s763
      %s765 = sshll.u32 %s6, 4
      %s766 = int_to_ptr.hbm [resolvable:$true] %s765
      %771 = dma.vmem_to_hbm [thread:$0]  %s764, 256, %s766, [#allocation3], 128, 128, 8
    $region29: #{encoder_layer_forward.1} parent=1 // pred_fallthru
      _
    // Predicated region
    $region30: #{encoder_layer_forward.1} parent=1 // pred_check
      _
    $region31: #{encoder_layer_forward.1} parent=1 // pred_check_branch
      %773 = sbr.rel (0) target = $region33
    $region32: #{encoder_layer_forward.1} parent=1 // pred_region
      %775 = dma.done [#allocation3], 256
    $region33: #{encoder_layer_forward.1} parent=1 // pred_fallthru
      _
    %776 = vsyncpa [#allocation3], 1

</llo_original>
